<compile_context>
chip_gen: v5e
topology: v5e:2x2
jax: 0.10.0
libtpu: 0.0.40
codegen_flags: <defaults>
</compile_context>

<pallas_src>
import functools

import jax
import jax.numpy as jnp
from jax import lax
from jax.experimental import pallas as pl
from jax.experimental.pallas import tpu as pltpu


def _confidence_ce_kernel(thr_ref, weak_ref, strong_ref, out_ref, *,
                          batch, tile_b, tiles_per_outer, mask_tail):
    """One (tile_b, C) batch tile; accumulates into a resident (1, 2, C) block.

    out_ref row 0 = confidence-masked one-hot class counts
    out_ref row 1 = confidence-masked per-class NLL sums
    """
    o = pl.program_id(0)      # "parallel" outer slice (one per TensorCore on v7x)
    i = pl.program_id(1)      # "arbitrary" inner accumulation axis

    # Resident accumulator: zero it on the first inner step of this outer slice.
    @pl.when(i == 0)
    def _():
        out_ref[...] = jnp.zeros_like(out_ref)

    threshold = thr_ref[0]
    weak = weak_ref[...].astype(jnp.float32)      # (tb, C)
    strong = strong_ref[...].astype(jnp.float32)  # (tb, C)
    tb, C = weak.shape

    if mask_tail:
        # Global row index of every tile row. Rows >= batch are padding: either the
        # ragged tail of the last real tile or a fully padded duplicate tile whose
        # DMA block index was clamped in the index_map.  Note `start` uses the
        # UNclamped linear tile index so duplicates contribute nothing.
        start = (o * tiles_per_outer + i) * tile_b
        row = lax.broadcasted_iota(jnp.int32, (tb, 1), 0) + start
        valid = row < batch                                      # (tb, 1)
    else:
        valid = None

    # softmax(weak): max prob == 1 / sum(exp(w - wmax)); first-argmax pseudo-label.
    wmax = jnp.max(weak, axis=-1, keepdims=True)
    wsum = jnp.sum(jnp.exp(weak - wmax), axis=-1, keepdims=True)
    max_prob = 1.0 / wsum   # exact; approx reciprocal could flip the threshold compare

    col = lax.broadcasted_iota(jnp.int32, (tb, C), 1)
    first_max = jnp.min(jnp.where(weak >= wmax, col, C), axis=-1, keepdims=True)
    onehot = (col == first_max).astype(jnp.float32)              # (tb, C)

    confident = max_prob > threshold                             # (tb, 1)
    if valid is not None:
        confident = jnp.logical_and(confident, valid)
    mask = confident.astype(jnp.float32)                         # (tb, 1)

    # Cross-entropy of the strong view at the pseudo-label:
    #   nll = logsumexp(strong) - strong[target]
    smax = jnp.max(strong, axis=-1, keepdims=True)
    logz = jnp.log(jnp.sum(jnp.exp(strong - smax), axis=-1, keepdims=True)) + smax
    picked = jnp.sum(onehot * strong, axis=-1, keepdims=True)
    nll = logz - picked                                          # (tb, 1)
    if valid is not None:
        # Narrow (tb,1) tail mask: padded-row garbage can be NaN, and 0*NaN would
        # leak through onehot_m * nll into s_c, so nll must be zeroed explicitly.
        nll = jnp.where(valid, nll, 0.0)

    onehot_m = onehot * mask                                     # (tb, C)
    counts = jnp.sum(onehot_m, axis=0, keepdims=True)            # (1, C)
    s_c = jnp.sum(onehot_m * nll, axis=0, keepdims=True)         # (1, C)

    # Direct per-row accumulation (no concat / zero padding temporaries).
    out_ref[0, 0:1, :] += counts
    out_ref[0, 1:2, :] += s_c


def _round_down8(x):
    return max(8, (x // 8) * 8)


def _vmem_limit_bytes():
    # Generation-aware scoped-VMEM budget: ~40% of physical capacity
    # (v5e/v6e: 128 MiB physical -> ~51 MiB; v7x: 64 MiB/TC -> ~25 MiB), with a
    # conservative fallback (treat as 64 MiB physical) if the query is unavailable.
    try:
        cap = int(pltpu.get_tpu_info().vmem_capacity_bytes)
    except Exception:
        cap = 64 * 1024 * 1024
    return int(max(16 * 1024 * 1024, min((cap * 2) // 5, 64 * 1024 * 1024)))


def _pick_tile_b(B, C, in_itemsize, vmem_budget):
    # Rows that fit the VMEM budget: 2 inputs x 2 (double-buffered) in the input
    # dtype plus ~10 live (tile_b, C) 32-bit temporaries inside the kernel.
    bytes_per_row = 2 * 2 * C * in_itemsize + 10 * C * 4
    fit = vmem_budget // max(bytes_per_row, 1)
    # Bytes-per-step target instead of a fixed row cap: stream ~2 MiB of input per
    # grid step so the ~0.35us per-step fixed cost is amortized (near HBM roofline)
    # even for small class counts C.
    target = (2 * 1024 * 1024) // max(2 * C * in_itemsize, 1)
    tb = min(fit, max(target, 8), max(B, 8))
    return _round_down8(tb)


def confidence_based_ce(anchors_weak, anchors_strong, threshold,
                        apply_class_balancing, *, tile_b=None):
    B, C = anchors_weak.shape
    assert anchors_strong.shape == (B, C)

    in_itemsize = jnp.dtype(anchors_weak.dtype).itemsize
    vmem_budget = _vmem_limit_bytes()
    if tile_b is None:
        tile_b = _pick_tile_b(B, C, in_itemsize, vmem_budget)
    tile_b = _round_down8(min(tile_b, max(B, 8)))

    total_tiles = pl.cdiv(B, tile_b)
    # 2-wide "parallel" outer axis: shards across TensorCores on v7x/v4/v5p megacore.
    # tile_b is NOT halved for this, and on single-TC parts it costs at most one
    # extra (fully masked) grid step, so it is applied whenever there are >=2 tiles.
    num_outer = 2 if total_tiles >= 2 else 1
    tiles_per_outer = pl.cdiv(total_tiles, num_outer)
    has_padded_tiles = num_outer * tiles_per_outer != total_tiles
    mask_tail = (B % tile_b != 0) or has_padded_tiles

    thr = jnp.asarray([threshold], dtype=jnp.float32)  # runtime SMEM scalar -> no recompile per value

    def in_map(o, i):
        t = o * tiles_per_outer + i
        if has_padded_tiles:
            # Keep the DMA in bounds for fully padded grid steps; the kernel masks
            # their contribution via the unclamped row index.
            t = jnp.minimum(t, total_tiles - 1)
        return (t, 0)

    kernel = functools.partial(
        _confidence_ce_kernel, batch=B, tile_b=tile_b,
        tiles_per_outer=tiles_per_outer, mask_tail=mask_tail)

    acc = pl.pallas_call(
        kernel,
        out_shape=jax.ShapeDtypeStruct((num_outer, 2, C), jnp.float32),
        grid_spec=pltpu.PrefetchScalarGridSpec(
            num_scalar_prefetch=0,
            grid=(num_outer, tiles_per_outer),
            in_specs=[pl.BlockSpec(memory_space=pltpu.MemorySpace.SMEM),  # threshold
                      pl.BlockSpec((tile_b, C), in_map),                  # weak logits
                      pl.BlockSpec((tile_b, C), in_map)],                 # strong logits
            out_specs=pl.BlockSpec((1, 2, C), lambda o, i: (o, 0, 0)),    # resident acc
        ),
        compiler_params=pltpu.CompilerParams(
            dimension_semantics=("parallel", "arbitrary"),
            vmem_limit_bytes=vmem_budget),
    )(thr, anchors_weak, anchors_strong)

    summed = jnp.sum(acc, axis=0)            # (2, C): at most 2 rows to fold
    counts = summed[0]                       # (C,) masked class counts
    s_c = summed[1]                          # (C,) masked per-class NLL sums
    n = jnp.sum(counts)                      # number of confident samples

    if apply_class_balancing:
        present = (counts > 0).astype(jnp.float32)
        safe_counts = jnp.where(counts > 0, counts, 1.0)
        # weighted mean with w[c] = n / counts[c]:
        #   numerator   = sum_c (n/counts_c) * s_c      = n * sum_c s_c / counts_c
        #   denominator = sum_c counts_c * (n/counts_c) = n * (#present classes)
        loss = jnp.sum(s_c / safe_counts) / jnp.sum(present)
    else:
        loss = jnp.sum(s_c) / n
    return loss


def _reference(weak, strong, threshold, balancing):
    """Pure-JAX reference mirroring the PyTorch module."""
    probs = jax.nn.softmax(weak, axis=1)
    max_prob = probs.max(axis=1)
    target = jnp.argmax(probs, axis=1)
    mask = (max_prob > threshold).astype(jnp.float32)
    n = mask.sum()
    C = weak.shape[1]
    counts = jnp.sum(jax.nn.one_hot(target, C) * mask[:, None], axis=0)
    logsm = jax.nn.log_softmax(strong, axis=1)
    nll = -jnp.take_along_axis(logsm, target[:, None], axis=1)[:, 0]
    if balancing:
        w = n / jnp.where(counts > 0, counts, 1.0)
        wi = w[target] * mask
        return jnp.sum(wi * nll) / jnp.sum(wi)
    return jnp.sum(nll * mask) / n


if __name__ == "__main__":
    key = jax.random.PRNGKey(0)
    k1, k2, k3, k4 = jax.random.split(key, 4)

    # Test 1: even batch, class balancing on.  Even rows get a +4 logit boost on
    # class (i % C) so the confidence mask is guaranteed non-empty (the PyTorch
    # module would raise otherwise) while odd rows exercise the mask.
    B, C = 16, 10
    even = (jnp.arange(B) % 2 == 0)[:, None].astype(jnp.float32)
    boost = 4.0 * jax.nn.one_hot(jnp.arange(B) % C, C) * even
    anchors_weak = jax.random.normal(k1, (B, C), dtype=jnp.float32) + boost
    anchors_strong = jax.random.normal(k2, (B, C), dtype=jnp.float32)
    loss = jax.block_until_ready(
        confidence_based_ce(anchors_weak, anchors_strong, 0.5, True))
    ref = _reference(anchors_weak, anchors_strong, 0.5, True)
    assert jnp.isfinite(loss), f"loss is not finite: {loss}"
    assert jnp.allclose(loss, ref, rtol=1e-5, atol=1e-5), f"{loss} vs {ref}"

    # Test 2: ragged batch (exercises tail masking + the 2-wide outer grid axis),
    # no class balancing.  threshold = 1/C, so every sample is confident (mask
    # provably non-empty).
    B2 = 13
    w2 = jax.random.normal(k3, (B2, C), dtype=jnp.float32)
    s2 = jax.random.normal(k4, (B2, C), dtype=jnp.float32)
    loss2 = jax.block_until_ready(confidence_based_ce(w2, s2, 0.1, False))
    ref2 = _reference(w2, s2, 0.1, False)
    assert jnp.isfinite(loss2), f"loss2 is not finite: {loss2}"
    assert jnp.allclose(loss2, ref2, rtol=1e-5, atol=1e-5), f"{loss2} vs {ref2}"

    print("KERNEL_OK")
</pallas_src>

<mosaic_0001>
module attributes {stable_mosaic.version = 11 : i64} {
  func.func @_confidence_ce_kernel(%arg0: i32, %arg1: i32, %arg2: memref<1xf32, #tpu.memory_space<smem>>, %arg3: memref<16x10xf32, #tpu.memory_space<vmem>>, %arg4: memref<16x10xf32, #tpu.memory_space<vmem>>, %arg5: memref<1x2x10xf32, #tpu.memory_space<vmem>>) attributes {dimension_semantics = [#tpu.dimension_semantics<parallel>, #tpu.dimension_semantics<arbitrary>], iteration_bounds = array<i64: 1, 1>, scalar_prefetch = 0 : i64, scratch_operands = 0 : i64, tpu.core_type = #tpu.core_type<tc>, window_params = [{transform_indices = @transform_0, window_bounds = array<i64: 1>}, {transform_indices = @transform_1, window_bounds = array<i64: 16, 10>}, {transform_indices = @transform_2, window_bounds = array<i64: 16, 10>}, {transform_indices = @transform_3, window_bounds = array<i64: 1, 2, 10>}]} {
    %c0_i32 = arith.constant 0 : i32
    %0 = arith.cmpi eq, %arg1, %c0_i32 : i32
    %1 = arith.extui %0 : i1 to i32
    %c0_i32_0 = arith.constant 0 : i32
    %2 = arith.cmpi ne, %1, %c0_i32_0 : i32
    scf.if %2 {
      %cst_24 = arith.constant 0.000000e+00 : f32
      %63 = vector.broadcast %cst_24 : f32 to vector<1x2x10xf32>
      %c0_25 = arith.constant 0 : index
      %c0_26 = arith.constant 0 : index
      %c0_27 = arith.constant 0 : index
      %64 = vector.load %arg5[%c0_25, %c0_26, %c0_27] : memref<1x2x10xf32, #tpu.memory_space<vmem>>, vector<1x2x10xf32>
      tpu.vector_store %arg5[%c0_25, %c0_26, %c0_27], %63 {strides = array<i32>} : memref<1x2x10xf32, #tpu.memory_space<vmem>>, vector<1x2x10xf32>,
    } else {
    }
    %c0 = arith.constant 0 : index
    %3 = memref.load %arg2[%c0] : memref<1xf32, #tpu.memory_space<smem>>
    %c0_1 = arith.constant 0 : index
    %c0_2 = arith.constant 0 : index
    %4 = vector.load %arg3[%c0_1, %c0_2] : memref<16x10xf32, #tpu.memory_space<vmem>>, vector<16x10xf32>
    %c0_3 = arith.constant 0 : index
    %c0_4 = arith.constant 0 : index
    %5 = vector.load %arg4[%c0_3, %c0_4] : memref<16x10xf32, #tpu.memory_space<vmem>>, vector<16x10xf32>
    %cst = arith.constant dense<0xFF800000> : vector<16xf32>
    %6 = vector.multi_reduction <maximumf>, %4, %cst [1] : vector<16x10xf32> to vector<16xf32>
    %7 = vector.shape_cast %6 : vector<16xf32> to vector<16x1xf32>
    %8 = vector.broadcast %7 : vector<16x1xf32> to vector<16x10xf32>
    %9 = arith.subf %4, %8 : vector<16x10xf32>
    %10 = math.exp %9 : vector<16x10xf32>
    %cst_5 = arith.constant dense<0.000000e+00> : vector<16xf32>
    %11 = vector.multi_reduction <add>, %10, %cst_5 [1] : vector<16x10xf32> to vector<16xf32>
    %12 = vector.shape_cast %11 : vector<16xf32> to vector<16x1xf32>
    %cst_6 = arith.constant 1.000000e+00 : f32
    %13 = vector.broadcast %cst_6 : f32 to vector<16x1xf32>
    %14 = arith.divf %13, %12 : vector<16x1xf32>
    %15 = tpu.iota {dimensions = array<i32: 1>} : vector<16x10xi32>
    %16 = vector.broadcast %7 : vector<16x1xf32> to vector<16x10xf32>
    %17 = arith.cmpf oge, %4, %16 : vector<16x10xf32>
    %c10_i32 = arith.constant 10 : i32
    %18 = vector.broadcast %c10_i32 : i32 to vector<16x10xi32>
    %19 = arith.select %17, %15, %18 : vector<16x10xi1>, vector<16x10xi32>
    %cst_7 = arith.constant dense<2147483647> : vector<16xi32>
    %20 = vector.multi_reduction <minsi>, %19, %cst_7 [1] : vector<16x10xi32> to vector<16xi32>
    %21 = vector.shape_cast %20 : vector<16xi32> to vector<16x1xi32>
    %22 = vector.broadcast %21 : vector<16x1xi32> to vector<16x10xi32>
    %23 = arith.cmpi eq, %15, %22 : vector<16x10xi32>
    %24 = arith.extui %23 : vector<16x10xi1> to vector<16x10xi32>
    %25 = arith.sitofp %24 : vector<16x10xi32> to vector<16x10xf32>
    %26 = vector.broadcast %3 : f32 to vector<16x1xf32>
    %27 = arith.cmpf ogt, %14, %26 : vector<16x1xf32>
    %28 = arith.extui %27 : vector<16x1xi1> to vector<16x1xi32>
    %29 = arith.sitofp %28 : vector<16x1xi32> to vector<16x1xf32>
    %cst_8 = arith.constant dense<0xFF800000> : vector<16xf32>
    %30 = vector.multi_reduction <maximumf>, %5, %cst_8 [1] : vector<16x10xf32> to vector<16xf32>
    %31 = vector.shape_cast %30 : vector<16xf32> to vector<16x1xf32>
    %32 = vector.broadcast %31 : vector<16x1xf32> to vector<16x10xf32>
    %33 = arith.subf %5, %32 : vector<16x10xf32>
    %34 = math.exp %33 : vector<16x10xf32>
    %cst_9 = arith.constant dense<0.000000e+00> : vector<16xf32>
    %35 = vector.multi_reduction <add>, %34, %cst_9 [1] : vector<16x10xf32> to vector<16xf32>
    %36 = vector.shape_cast %35 : vector<16xf32> to vector<16x1xf32>
    %37 = math.log %36 : vector<16x1xf32>
    %38 = arith.addf %37, %31 : vector<16x1xf32>
    %39 = arith.mulf %25, %5 : vector<16x10xf32>
    %cst_10 = arith.constant dense<0.000000e+00> : vector<16xf32>
    %40 = vector.multi_reduction <add>, %39, %cst_10 [1] : vector<16x10xf32> to vector<16xf32>
    %41 = vector.shape_cast %40 : vector<16xf32> to vector<16x1xf32>
    %42 = arith.subf %38, %41 : vector<16x1xf32>
    %43 = vector.broadcast %29 : vector<16x1xf32> to vector<16x10xf32>
    %44 = arith.mulf %25, %43 : vector<16x10xf32>
    %cst_11 = arith.constant dense<0.000000e+00> : vector<10xf32>
    %45 = vector.multi_reduction <add>, %44, %cst_11 [0] : vector<16x10xf32> to vector<10xf32>
    %46 = vector.shape_cast %45 : vector<10xf32> to vector<1x10xf32>
    %47 = vector.broadcast %42 : vector<16x1xf32> to vector<16x10xf32>
    %48 = arith.mulf %44, %47 : vector<16x10xf32>
    %cst_12 = arith.constant dense<0.000000e+00> : vector<10xf32>
    %49 = vector.multi_reduction <add>, %48, %cst_12 [0] : vector<16x10xf32> to vector<10xf32>
    %50 = vector.shape_cast %49 : vector<10xf32> to vector<1x10xf32>
    %c0_13 = arith.constant 0 : index
    %c0_14 = arith.constant 0 : index
    %c0_15 = arith.constant 0 : index
    %51 = vector.load %arg5[%c0_13, %c0_14, %c0_15] : memref<1x2x10xf32, #tpu.memory_space<vmem>>, vector<1x1x10xf32>
    %52 = vector.shape_cast %51 : vector<1x1x10xf32> to vector<1x10xf32>
    %53 = arith.addf %52, %46 : vector<1x10xf32>
    %c0_16 = arith.constant 0 : index
    %c0_17 = arith.constant 0 : index
    %c0_18 = arith.constant 0 : index
    %54 = vector.load %arg5[%c0_16, %c0_17, %c0_18] : memref<1x2x10xf32, #tpu.memory_space<vmem>>, vector<1x1x10xf32>
    %55 = vector.shape_cast %54 : vector<1x1x10xf32> to vector<1x10xf32>
    %56 = vector.shape_cast %53 : vector<1x10xf32> to vector<1x1x10xf32>
    tpu.vector_store %arg5[%c0_16, %c0_17, %c0_18], %56 {strides = array<i32>} : memref<1x2x10xf32, #tpu.memory_space<vmem>>, vector<1x1x10xf32>,
    %c0_19 = arith.constant 0 : index
    %c1 = arith.constant 1 : index
    %c0_20 = arith.constant 0 : index
    %57 = vector.load %arg5[%c0_19, %c1, %c0_20] : memref<1x2x10xf32, #tpu.memory_space<vmem>>, vector<1x1x10xf32>
    %58 = vector.shape_cast %57 : vector<1x1x10xf32> to vector<1x10xf32>
    %59 = arith.addf %58, %50 : vector<1x10xf32>
    %c0_21 = arith.constant 0 : index
    %c1_22 = arith.constant 1 : index
    %c0_23 = arith.constant 0 : index
    %60 = vector.load %arg5[%c0_21, %c1_22, %c0_23] : memref<1x2x10xf32, #tpu.memory_space<vmem>>, vector<1x1x10xf32>
    %61 = vector.shape_cast %60 : vector<1x1x10xf32> to vector<1x10xf32>
    %62 = vector.shape_cast %59 : vector<1x10xf32> to vector<1x1x10xf32>
    tpu.vector_store %arg5[%c0_21, %c1_22, %c0_23], %62 {strides = array<i32>} : memref<1x2x10xf32, #tpu.memory_space<vmem>>, vector<1x1x10xf32>,
    return
  }
  func.func @transform_0(%arg0: i32, %arg1: i32) -> i32 {
    %c0_i32 = arith.constant 0 : i32
    %c0_i32_0 = arith.constant 0 : i32
    return %c0_i32 : i32
  }
  func.func @transform_1(%arg0: i32, %arg1: i32) -> (i32, i32) {
    %c1_i32 = arith.constant 1 : i32
    %0 = arith.muli %arg0, %c1_i32 : i32
    %1 = arith.addi %0, %arg1 : i32
    %c0_i32 = arith.constant 0 : i32
    %c0_i32_0 = arith.constant 0 : i32
    return %1, %c0_i32 : i32, i32
  }
  func.func @transform_2(%arg0: i32, %arg1: i32) -> (i32, i32) {
    %c1_i32 = arith.constant 1 : i32
    %0 = arith.muli %arg0, %c1_i32 : i32
    %1 = arith.addi %0, %arg1 : i32
    %c0_i32 = arith.constant 0 : i32
    %c0_i32_0 = arith.constant 0 : i32
    return %1, %c0_i32 : i32, i32
  }
  func.func @transform_3(%arg0: i32, %arg1: i32) -> (i32, i32, i32) {
    %c0_i32 = arith.constant 0 : i32
    %c0_i32_0 = arith.constant 0 : i32
    %c0_i32_1 = arith.constant 0 : i32
    return %arg0, %c0_i32, %c0_i32_0 : i32, i32, i32
  }
}

</mosaic_0001>

<llo_original>
// kernel: tpu_custom_call.1
$region0: #{tpu_custom_call.1}
  #allocation0 [shape = 'u32[]', space=smem, size = 0x4, offset = 0x4, fixed_abs, tag = 'smem constant byte address 0x4 - core index']
  #allocation1 [shape = 'u32[72,128]{1,0:T(1,128)}', space=vmem, size = 0x9000, scoped, tag = 'internal scratch']
  #allocation2 [shape = 'f32[1]{0:T(128)S(6)}', space=smem, size = 0x200, scoped, tag = 'scoped memory for tpu_custom_call.1']
  %s0 = inlined_call_operand.<no memory space> [shape: f32[1], index: 0, kind: input, shape index: {}]
  %s1 = inlined_call_operand.hbm [shape: f32[16,10], index: 1, kind: input, shape index: {}]
  %s2 = inlined_call_operand.hbm [shape: f32[16,10], index: 2, kind: input, shape index: {}]
  %s3 = inlined_call_operand.hbm [shape: f32[1,2,10], index: 3, kind: output, shape index: {}]
  %s4 = sld [smem:[#allocation0]]
  $region34: #{tpu_custom_call.1} parent=0
    _
  %s6 = ssub.s32 1, %s4
  %s7 = scalar_select 0, %s6, %s4
  %8 = sst [smem:[#allocation2]] %s0
  $region1: #{tpu_custom_call.1} parent=0
    #allocation3 [shape = 'u8[8192]{0}', space=vmem, size = 0x2000, scoped, tag = 'input window, operand 1, single buffered']
    #allocation4 [shape = 's32[1]{0}', space=sflag, size = 0x4, scoped, tag = 'scoped memory for tpu_custom_call.1']
    #allocation5 [shape = 's32[1]{0}', space=sflag, size = 0x4, scoped, tag = 'scoped memory for tpu_custom_call.1']
    #allocation6 [shape = 'u8[8192]{0}', space=vmem, size = 0x2000, scoped, tag = 'input window, operand 2, single buffered']
    #allocation7 [shape = 's32[1]{0}', space=sflag, size = 0x4, scoped, tag = 'scoped memory for tpu_custom_call.1']
    #allocation8 [shape = 'u8[1024]{0}', space=vmem, size = 0x400, scoped, tag = 'output window, operand 0, single buffered']
    %9 = vsyncpa [#allocation4], 0
    %10 = vsyncpa [#allocation7], 0
    %11 = vsyncpa [#allocation5], 0
    // Predicated region
    $region2: #{tpu_custom_call.1} parent=1 // pred_check
      _
    $region3: #{tpu_custom_call.1} parent=1 // pred_check_branch
      %13 = sbr.rel (0) target = $region5
    $region4: #{tpu_custom_call.1} parent=1 // pred_region
      _
    $region5: #{tpu_custom_call.1} parent=1 // pred_fallthru
      _
    // Predicated region
    $region6: #{tpu_custom_call.1} parent=1 // pred_check
      _
    $region7: #{tpu_custom_call.1} parent=1 // pred_check_branch
      %15 = sbr.rel (0) target = $region9
    $region8: #{tpu_custom_call.1} parent=1 // pred_region
      %s16 = sadd.s32 0, 0
      %s17 = smul.u32 2, %s16
      %19 = vsyncadd [#allocation4], 0
      %s20 = smul.addr %s17, 8
      %s21 = scalar_lea.hbm %s1, %s20
      %s22 = sshll.u32 %s21, 4
      %s23 = int_to_ptr.hbm [resolvable:$true] %s22
      %s24 = sshll.u32 [#allocation3], 4
      %s25 = int_to_ptr.vmem [resolvable:$true] %s24
      %30 = dma.hbm_to_vmem [thread:$0]  %s23, 256, %s25, [#allocation4], 128, 128, 8
    $region9: #{tpu_custom_call.1} parent=1 // pred_fallthru
      _
    // Predicated region
    $region10: #{tpu_custom_call.1} parent=1 // pred_check
      _
    $region11: #{tpu_custom_call.1} parent=1 // pred_check_branch
      %32 = sbr.rel (0) target = $region13
    $region12: #{tpu_custom_call.1} parent=1 // pred_region
      %s33 = sadd.s32 0, 0
      %s34 = smul.u32 2, %s33
      %36 = vsyncadd [#allocation7], 0
      %s37 = smul.addr %s34, 8
      %s38 = scalar_lea.hbm %s2, %s37
      %s39 = sshll.u32 %s38, 4
      %s40 = int_to_ptr.hbm [resolvable:$true] %s39
      %s41 = sshll.u32 [#allocation6], 4
      %s42 = int_to_ptr.vmem [resolvable:$true] %s41
      %47 = dma.hbm_to_vmem [thread:$0]  %s40, 256, %s42, [#allocation7], 128, 128, 8
    $region13: #{tpu_custom_call.1} parent=1 // pred_fallthru
      _
    // Predicated region
    $region14: #{tpu_custom_call.1} parent=1 // pred_check
      _
    $region15: #{tpu_custom_call.1} parent=1 // pred_check_branch
      %49 = sbr.rel (0) target = $region17
    $region16: #{tpu_custom_call.1} parent=1 // pred_region
      %51 = dma.done [#allocation4], 256
    $region17: #{tpu_custom_call.1} parent=1 // pred_fallthru
      _
    // Predicated region
    $region18: #{tpu_custom_call.1} parent=1 // pred_check
      _
    $region19: #{tpu_custom_call.1} parent=1 // pred_check_branch
      %53 = sbr.rel (0) target = $region21
    $region20: #{tpu_custom_call.1} parent=1 // pred_region
      %55 = dma.done [#allocation7], 256
    $region21: #{tpu_custom_call.1} parent=1 // pred_fallthru
      _
    %s56 = sadd.s32 0, 0
    %s57 = smul.u32 2, %s56
    %s58 = sadd.s32 0, 0
    %s59 = smul.u32 2, %s58
    %p60 = scmp.eq.s32.totalorder 0, 0
    // Predicated region
    $region22: #{tpu_custom_call.1} parent=1 // pred_check
      %p61 = pneg %p60
    $region23: #{tpu_custom_call.1} parent=1 // pred_check_branch
      %63 = sbr.rel (%p61) target = $region25
    $region24: #{tpu_custom_call.1} parent=1 // pred_region
      %vm64 = vcmask 74752
      %65 = vst.msk [vmem:[#allocation8] sm:$0x3] %vm64, 0.0
    $region25: #{tpu_custom_call.1} parent=1 // pred_fallthru
      _
    %s66 = sld [smem:[#allocation2]]
    %v67 = vld [vmem:[#allocation3] sm:$0xff]
    %v68 = vld [vmem:[#allocation3 + $0x8] sm:$0xff]
    %v69 = vld [vmem:[#allocation6] sm:$0xff]
    %v70 = vld [vmem:[#allocation6 + $0x8] sm:$0xff]
    %vm71 = vcmask 80896
    %v72 = vsel %vm71, %v67, -inf
    %73 = vmax.xlane.f32.xlu0 %v72
    %v74 = vpop.xlane.xlu0 %73
    %v75 = vsel %vm71, %v68, -inf
    %76 = vmax.xlane.f32.xlu0 %v75
    %v77 = vpop.xlane.xlu0 %76
    %v78 = vsub.f32 %v67, %v74
    %v79 = vsub.f32 %v68, %v77
    %v80 = vmul.f32 %v78, 1.442695
    %v81 = vpow.pop %v80
    %v82 = vmul.f32 %v79, 1.442695
    %v83 = vpow.pop %v82
    %v84 = vsel %vm71, %v81, 0.0
    %85 = vadd.xlane.f32.xlu0 %v84
    %v86 = vpop.xlane.xlu0 %85
    %v87 = vsel %vm71, %v83, 0.0
    %88 = vadd.xlane.f32.xlu0 %v87
    %v89 = vpop.xlane.xlu0 %88
    %v90 = vrcp.pop %v86
    %v91 = vmul.f32 %v86, %v90
    %v92 = vsub.f32 1.0, %v91
    %v93 = vmul.f32 %v90, %v92
    %v94 = vadd.f32 %v90, %v93
    %vm95 = vweird.f32 %v86
    %vm96 = vweird.f32 %v90
    %vm97 = vmor %vm95, %vm96
    %v98 = vsel %vm97, %v90, %v94
    %v99 = vand.u32 2147483647, %v86
    %vm100 = vcmp.eq.f32.partialorder %v99, 8.507059e+37
    %v101 = vand.u32 %v86, 2147483648
    %v102 = vor.u32 1.1754944e-38, %v101
    %v103 = vsel %vm100, %v102, %v98
    %v104 = vmul.f32 1.0, %v103
    %v105 = vrcp.pop %v89
    %v106 = vmul.f32 %v89, %v105
    %v107 = vsub.f32 1.0, %v106
    %v108 = vmul.f32 %v105, %v107
    %v109 = vadd.f32 %v105, %v108
    %vm110 = vweird.f32 %v89
    %vm111 = vweird.f32 %v105
    %vm112 = vmor %vm110, %vm111
    %v113 = vsel %vm112, %v105, %v109
    %v114 = vand.u32 2147483647, %v89
    %vm115 = vcmp.eq.f32.partialorder %v114, 8.507059e+37
    %v116 = vand.u32 %v89, 2147483648
    %v117 = vor.u32 1.1754944e-38, %v116
    %v118 = vsel %vm115, %v117, %v113
    %v119 = vmul.f32 1.0, %v118
    %v120 = vlaneseq
    %v121 = vand.u32 %v120, 127
    %vm122 = vcmp.ge.f32.partialorder %v67, %v74
    %vm123 = vcmp.ge.f32.partialorder %v68, %v77
    %v124 = vsel %vm122, %v121, 10
    %v125 = vsel %vm123, %v121, 10
    %v126 = vsel %vm71, %v124, 2147483647
    %v127 = vand.u32 %v126, 65535
    %v128 = vshra.s32 %v126, 16
    %v129 = vcvt.s32.f32 %v127
    %v130 = vcvt.s32.f32 %v128
    %131 = vmin.xlane.f32.xlu0 %v130
    %v132 = vpop.xlane.xlu0 %131
    %vm133 = vcmp.eq.f32.partialorder %v130, %v132
    %v134 = vsel %vm133, %v129, inf
    %135 = vmin.xlane.f32.xlu0 %v134
    %v136 = vpop.xlane.xlu0 %135
    %v137 = vcvt.f32.s32 %v136
    %v138 = vcvt.f32.s32 %v132
    %v139 = vshll.u32 %v138, 16
    %v140 = vadd.s32 %v139, %v137
    %v141 = vsel %vm71, %v125, 2147483647
    %v142 = vand.u32 %v141, 65535
    %v143 = vshra.s32 %v141, 16
    %v144 = vcvt.s32.f32 %v142
    %v145 = vcvt.s32.f32 %v143
    %146 = vmin.xlane.f32.xlu0 %v145
    %v147 = vpop.xlane.xlu0 %146
    %vm148 = vcmp.eq.f32.partialorder %v145, %v147
    %v149 = vsel %vm148, %v144, inf
    %150 = vmin.xlane.f32.xlu0 %v149
    %v151 = vpop.xlane.xlu0 %150
    %v152 = vcvt.f32.s32 %v151
    %v153 = vcvt.f32.s32 %v147
    %v154 = vshll.u32 %v153, 16
    %v155 = vadd.s32 %v154, %v152
    %vm156 = vcmp.eq.s32.totalorder %v121, %v140
    %vm157 = vcmp.eq.s32.totalorder %v121, %v155
    %v158 = vsel %vm156, 1, 0
    %v159 = vsel %vm157, 1, 0
    %v160 = vcvt.s32.f32 %v158
    %v161 = vcvt.s32.f32 %v159
    %v162 = vstv %s66
    %vm163 = vcmp.gt.f32.partialorder %v104, %v162
    %vm164 = vcmp.gt.f32.partialorder %v119, %v162
    %v165 = vsel %vm163, 1, 0
    %v166 = vsel %vm164, 1, 0
    %v167 = vcvt.s32.f32 %v165
    %v168 = vcvt.s32.f32 %v166
    %v169 = vsel %vm71, %v69, -inf
    %170 = vmax.xlane.f32.xlu0 %v169
    %v171 = vpop.xlane.xlu0 %170
    %v172 = vsel %vm71, %v70, -inf
    %173 = vmax.xlane.f32.xlu0 %v172
    %v174 = vpop.xlane.xlu0 %173
    %v175 = vsub.f32 %v69, %v171
    %v176 = vsub.f32 %v70, %v174
    %v177 = vmul.f32 %v175, 1.442695
    %v178 = vpow.pop %v177
    %v179 = vmul.f32 %v176, 1.442695
    %v180 = vpow.pop %v179
    %v181 = vsel %vm71, %v178, 0.0
    %182 = vadd.xlane.f32.xlu0 %v181
    %v183 = vpop.xlane.xlu0 %182
    %v184 = vsel %vm71, %v180, 0.0
    %185 = vadd.xlane.f32.xlu0 %v184
    %v186 = vpop.xlane.xlu0 %185
    %v187 = vlog2.pop %v183
    %v188 = vmul.f32 %v187, 0.6931472
    %v189 = vlog2.pop %v186
    %v190 = vmul.f32 %v189, 0.6931472
    %v191 = vadd.f32 %v188, %v171
    %v192 = vadd.f32 %v190, %v174
    %v193 = vmul.f32 %v160, %v69
    %v194 = vmul.f32 %v161, %v70
    %v195 = vsel %vm71, %v193, 0.0
    %196 = vadd.xlane.f32.xlu0 %v195
    %v197 = vpop.xlane.xlu0 %196
    %v198 = vsel %vm71, %v194, 0.0
    %199 = vadd.xlane.f32.xlu0 %v198
    %v200 = vpop.xlane.xlu0 %199
    %v201 = vsub.f32 %v191, %v197
    %v202 = vsub.f32 %v192, %v200
    %v203 = vmul.f32 %v160, %v167
    %v204 = vmul.f32 %v161, %v168
    %v205 = vsel %vm71, %v203, 0.0
    %v206 = vsel %vm71, %v204, 0.0
    %v207 = vadd.f32 %v205, %v206
    %v208 = vrot.slane %v207, 4
    %v209 = vadd.f32 %v207, %v208
    %v210 = vrot.slane %v209, 2
    %v211 = vadd.f32 %v209, %v210
    %v212 = vrot.slane %v211, 1
    %v213 = vadd.f32 %v211, %v212
    %v214 = vmul.f32 %v203, %v201
    %v215 = vmul.f32 %v204, %v202
    %v216 = vsel %vm71, %v214, 0.0
    %v217 = vsel %vm71, %v215, 0.0
    %v218 = vadd.f32 %v216, %v217
    %v219 = vrot.slane %v218, 4
    %v220 = vadd.f32 %v218, %v219
    %v221 = vrot.slane %v220, 2
    %v222 = vadd.f32 %v220, %v221
    %v223 = vrot.slane %v222, 1
    %v224 = vadd.f32 %v222, %v223
    %v225 = vld [vmem:[#allocation8] sm:$0x1]
    %v226 = vadd.f32 %v225, %v213
    %vm227 = vcmask 73728
    %228 = vst.msk [vmem:[#allocation8] sm:$0x1] %vm227, %v226
    %v229 = vld [vmem:[#allocation8 + $0x1] sm:$0x1]
    %v230 = vadd.f32 %v229, %v224
    %231 = vst.msk [vmem:[#allocation8 + $0x1] sm:$0x1] %vm227, %v230
    // Predicated region
    $region26: #{tpu_custom_call.1} parent=1 // pred_check
      _
    $region27: #{tpu_custom_call.1} parent=1 // pred_check_branch
      %233 = sbr.rel (0) target = $region29
    $region28: #{tpu_custom_call.1} parent=1 // pred_region
      %235 = vsyncadd [#allocation5], 0
      %s237 = sshll.u32 [#allocation8], 4
      %s238 = int_to_ptr.vmem [resolvable:$true] %s237
      %s239 = sshll.u32 %s3, 4
      %s240 = int_to_ptr.hbm [resolvable:$true] %s239
      %242 = dma.vmem_to_hbm [thread:$0]  %s238, 32, %s240, [#allocation5]
    $region29: #{tpu_custom_call.1} parent=1 // pred_fallthru
      _
    // Predicated region
    $region30: #{tpu_custom_call.1} parent=1 // pred_check
      _
    $region31: #{tpu_custom_call.1} parent=1 // pred_check_branch
      %244 = sbr.rel (0) target = $region33
    $region32: #{tpu_custom_call.1} parent=1 // pred_region
      %246 = dma.done [#allocation5], 32
    $region33: #{tpu_custom_call.1} parent=1 // pred_fallthru
      _
    %247 = vsyncpa [#allocation4], 1
    %248 = vsyncpa [#allocation7], 1
    %249 = vsyncpa [#allocation5], 1

</llo_original>
